<compile_context>
chip_gen: v7x
topology: tpu7x:2x2x1
jax: 0.10.0
libtpu: 0.0.40
codegen_flags: <defaults>
</compile_context>

<pallas_src>
import functools
import math

import jax
import jax.numpy as jnp
from jax import lax
from jax.experimental import pallas as pl
from jax.experimental.pallas import tpu as pltpu

LR_MUL = 0.01
NEG_SLOPE = 0.2
SQRT2 = math.sqrt(2.0)


def _round_up(n, m):
    return ((n + m - 1) // m) * m


def _cdiv(a, b):
    return -(-a // b)


# ---------------------------------------------------------------------------
# Kernels
# ---------------------------------------------------------------------------
def _resident_kernel(x_ref, w_ref, b_ref, o_ref):
    """Weight-resident variant.  grid = (batch_tiles,).

    x_ref: (tb, D)   f32 activation tile.
    w_ref: (L, D, D) bf16 pre-transposed weights; equal-lr scale and sqrt(2)
                     activation gain already folded in.
    b_ref: (L, 1, D) f32 biases, pre-scaled by lr_mul * sqrt(2).
    """
    x = x_ref[...].astype(jnp.float32)

    # PixelNorm (f32): x * rsqrt(mean(x**2, feature_dim) + 1e-8).
    ms = jnp.mean(x * x, axis=-1, keepdims=True)
    x = x * lax.rsqrt(ms + 1e-8)

    # L x (EqualLinear + fused leaky ReLU).  Scale/gain folded into w, b, so
    # the epilogue is one add + one max per element.
    num_layers = w_ref.shape[0]
    for l in range(num_layers):          # static unroll; traced once
        y = jnp.dot(x.astype(jnp.bfloat16), w_ref[l],
                    preferred_element_type=jnp.float32)
        z = y + b_ref[l]
        x = jnp.maximum(z, NEG_SLOPE * z)

    o_ref[...] = x.astype(o_ref.dtype)


def _streamed_kernel(x_ref, w_ref, b_ref, o_ref, act_ref):
    """Layer-streaming variant.  grid = (batch_tiles, L), L innermost.

    One layer's (1, D, D) weight block is DMAed per grid step (overlaps with
    the previous layer's matmul); weight VMEM residency is 2 * D*D*2 bytes
    regardless of L.  The f32 activation is carried across the layer axis in
    a VMEM scratch.
    """
    l = pl.program_id(1)

    @pl.when(l == 0)
    def _():
        x = x_ref[...].astype(jnp.float32)
        ms = jnp.mean(x * x, axis=-1, keepdims=True)
        act_ref[...] = x * lax.rsqrt(ms + 1e-8)

    y = jnp.dot(act_ref[...].astype(jnp.bfloat16), w_ref[0],
                preferred_element_type=jnp.float32)
    z = y + b_ref[0]
    act_ref[...] = jnp.maximum(z, NEG_SLOPE * z)

    @pl.when(l == pl.num_programs(1) - 1)
    def _():
        o_ref[...] = act_ref[...].astype(o_ref.dtype)


# ---------------------------------------------------------------------------
# Parameter preparation (one-time; do NOT repeat per forward call)
# ---------------------------------------------------------------------------
def prepare_params(weights, biases, *, lr_mul=LR_MUL):
    """weights: (L, D_out, D_in) raw EqualLinear weights, biases: (L, D_out).

    Returns:
      w_t: (L, D_in, D_out) bf16, transposed, pre-scaled by
           lr_mul * sqrt(2) / sqrt(D_in)  (equal-lr scale + lrelu gain folded).
      b:   (L, 1, D_out)    f32, pre-scaled by lr_mul * sqrt(2).
    """
    d_in = weights.shape[-1]
    scale = (1.0 / math.sqrt(d_in)) * lr_mul * SQRT2
    w_t = (jnp.transpose(weights, (0, 2, 1)).astype(jnp.float32)
           * scale).astype(jnp.bfloat16)
    b = (biases.astype(jnp.float32) * (lr_mul * SQRT2))[:, None, :]
    return w_t, b


# ---------------------------------------------------------------------------
# Forward wrapper
# ---------------------------------------------------------------------------
def layers_group_forward(x, w_t, b, *, tile_b=128, weight_resident=None):
    """x: (B, D) float32.  w_t / b: from prepare_params."""
    B, D = x.shape
    L, d_in, d_out = w_t.shape
    assert d_in == D and d_out == D, "MapperLayer is square (latent_dim -> latent_dim)"

    # ---- Near-tight batch tiling: minimal number of <=tile_b tiles, tile
    # rounded to a sublane multiple (8).  Padded rows are exact zeros, which
    # PixelNorm maps back to zeros (0 * rsqrt(1e-8) == 0); they are sliced off.
    n_tiles = _cdiv(B, tile_b)
    tb = _round_up(_cdiv(B, n_tiles), 8)
    B_pad = n_tiles * tb
    x_p = x if B_pad == B else jnp.pad(x, ((0, B_pad - B), (0, 0)))

    w_bytes = L * D * D * 2            # bf16 weight stack (HBM bytes)
    if weight_resident is None:
        # Stream one layer's weights per grid step in the common small-batch,
        # weight-bandwidth-bound regime; keep the full stack VMEM-resident only
        # when it is reused across many batch tiles and comfortably fits VMEM.
        weight_resident = (n_tiles >= 4) and (2 * w_bytes <= (24 << 20))

    if weight_resident:
        vmem_est = (2 * tb * D * 4          # x double buffer
                    + 2 * w_bytes           # weight double buffer
                    + 2 * L * D * 4         # bias double buffer
                    + 2 * tb * D * 4)       # out double buffer
        cost = pl.CostEstimate(
            flops=2 * B_pad * D * D * L,
            transcendentals=B_pad,
            bytes_accessed=(2 * B_pad * D * 4 + w_bytes + L * D * 4))
        out = pl.pallas_call(
            _resident_kernel,
            out_shape=jax.ShapeDtypeStruct((B_pad, D), x.dtype),
            grid_spec=pltpu.PrefetchScalarGridSpec(
                num_scalar_prefetch=0,
                grid=(n_tiles,),
                in_specs=[
                    pl.BlockSpec((tb, D), lambda i: (i, 0)),
                    # Grid-invariant weights / biases: constant index_map ->
                    # fetched once and kept resident across batch tiles.
                    pl.BlockSpec((L, D, D), lambda i: (0, 0, 0)),
                    pl.BlockSpec((L, 1, D), lambda i: (0, 0, 0)),
                ],
                out_specs=pl.BlockSpec((tb, D), lambda i: (i, 0)),
            ),
            compiler_params=pltpu.CompilerParams(
                # Many independent batch tiles (compute-bound regime): let a
                # multi-core chip shard them.
                dimension_semantics=("parallel",),
                vmem_limit_bytes=int(min(max(2 * vmem_est, 32 << 20), 64 << 20)),
            ),
            cost_estimate=cost,
        )(x_p, w_t, b)
    else:
        vmem_est = (2 * tb * D * 4          # x double buffer
                    + 2 * D * D * 2         # one-layer weight double buffer
                    + 2 * D * 4             # bias double buffer
                    + 2 * tb * D * 4        # out double buffer
                    + tb * D * 4)           # activation scratch
        cost = pl.CostEstimate(
            flops=2 * B_pad * D * D * L,
            transcendentals=B_pad,
            bytes_accessed=(2 * B_pad * D * 4
                            + n_tiles * (w_bytes + L * D * 4)))
        out = pl.pallas_call(
            _streamed_kernel,
            out_shape=jax.ShapeDtypeStruct((B_pad, D), x.dtype),
            grid_spec=pltpu.PrefetchScalarGridSpec(
                num_scalar_prefetch=0,
                grid=(n_tiles, L),
                in_specs=[
                    # x tile is invariant along the layer axis -> DMAed once
                    # per batch tile.
                    pl.BlockSpec((tb, D), lambda i, l: (i, 0)),
                    pl.BlockSpec((1, D, D), lambda i, l: (l, 0, 0)),
                    pl.BlockSpec((1, 1, D), lambda i, l: (l, 0, 0)),
                ],
                out_specs=pl.BlockSpec((tb, D), lambda i, l: (i, 0)),
                scratch_shapes=[pltpu.VMEM((tb, D), jnp.float32)],
            ),
            compiler_params=pltpu.CompilerParams(
                # Keep the batch axis serial: this path is chosen in the
                # weight-bandwidth-bound regime, where sharding it across v7x
                # cores would only duplicate the weight HBM stream.
                dimension_semantics=("arbitrary", "arbitrary"),
                vmem_limit_bytes=int(min(max(2 * vmem_est, 32 << 20), 64 << 20)),
            ),
            cost_estimate=cost,
        )(x_p, w_t, b)

    return out if B_pad == B else out[:B]


# ---------------------------------------------------------------------------
# Pure-JAX references
# ---------------------------------------------------------------------------
def _reference_forward_f32(x, weights, biases, *, lr_mul=LR_MUL):
    """f32 reference of the module semantics (loose sanity check)."""
    D = x.shape[-1]
    scale = (1.0 / math.sqrt(D)) * lr_mul
    y = x * lax.rsqrt(jnp.mean(x * x, axis=-1, keepdims=True) + 1e-8)
    for l in range(weights.shape[0]):
        z = jnp.dot(y, weights[l].T * scale,
                    precision=lax.Precision.HIGHEST) + biases[l] * lr_mul
        y = jnp.where(z >= 0.0, z, NEG_SLOPE * z) * SQRT2
    return y


def _reference_forward_bf16(x, weights, biases, *, lr_mul=LR_MUL):
    """Reference matching the kernel's numerics (pre-scaled bf16 weights,
    bf16 activations into the matmul, f32 accumulation, folded sqrt(2) gain)."""
    D = x.shape[-1]
    scale = (1.0 / math.sqrt(D)) * lr_mul * SQRT2
    y = x * lax.rsqrt(jnp.mean(x * x, axis=-1, keepdims=True) + 1e-8)
    for l in range(weights.shape[0]):
        wl = (weights[l].T * scale).astype(jnp.bfloat16).astype(jnp.float32)
        yb = y.astype(jnp.bfloat16).astype(jnp.float32)
        z = jnp.dot(yb, wl, precision=lax.Precision.HIGHEST) \
            + biases[l] * (lr_mul * SQRT2)
        y = jnp.maximum(z, NEG_SLOPE * z)
    return y


if __name__ == "__main__":
    # Small, module-consistent shapes: latent_dim=256 (lane-aligned),
    # num_layers=4 (module default), batch=12 (exercises sublane padding).
    B, D, L = 12, 256, 4

    key = jax.random.PRNGKey(0)
    kx, kw, kb = jax.random.split(key, 3)

    x = jax.random.normal(kx, (B, D), dtype=jnp.float32)
    # EqualLinear init: weight ~ N(0,1) / lr_mul ; bias small.
    weights = jax.random.normal(kw, (L, D, D), dtype=jnp.float32) / LR_MUL
    biases = jax.random.normal(kb, (L, D), dtype=jnp.float32) * 0.1

    # One-time parameter preparation (transpose + scale fold + bf16 cast).
    w_t, b_prep = prepare_params(weights, biases)

    ref_bf16 = _reference_forward_bf16(x, weights, biases)
    ref_f32 = _reference_forward_f32(x, weights, biases)

    # Default small-batch path: layer-streaming pipeline, single batch tile.
    out_stream = jax.block_until_ready(layers_group_forward(x, w_t, b_prep))
    assert out_stream.shape == (B, D)
    assert jnp.allclose(out_stream, ref_bf16, atol=5e-3, rtol=5e-3), \
        "streamed path mismatch vs bf16-matched reference"
    assert jnp.allclose(out_stream, ref_f32, atol=1e-1, rtol=1e-1), \
        "streamed path mismatch vs f32 reference"

    # Weight-resident path (auto-selected when there are many batch tiles);
    # force it here at small shapes to exercise that branch too.
    out_res = jax.block_until_ready(
        layers_group_forward(x, w_t, b_prep, weight_resident=True))
    assert out_res.shape == (B, D)
    assert jnp.allclose(out_res, ref_bf16, atol=5e-3, rtol=5e-3), \
        "resident path mismatch vs bf16-matched reference"
    assert jnp.allclose(out_res, ref_f32, atol=1e-1, rtol=1e-1), \
        "resident path mismatch vs f32 reference"

    print("KERNEL_OK")
</pallas_src>

<mosaic_0001>
module attributes {stable_mosaic.version = 11 : i64} {
  func.func @_streamed_kernel(%arg0: i32, %arg1: i32, %arg2: memref<16x256xf32, #tpu.memory_space<vmem>>, %arg3: memref<1x256x256xbf16, #tpu.memory_space<vmem>>, %arg4: memref<1x1x256xf32, #tpu.memory_space<vmem>>, %arg5: memref<16x256xf32, #tpu.memory_space<vmem>>, %arg6: memref<16x256xf32, #tpu.memory_space<vmem>>) attributes {dimension_semantics = [#tpu.dimension_semantics<arbitrary>, #tpu.dimension_semantics<arbitrary>], iteration_bounds = array<i64: 1, 4>, scalar_prefetch = 0 : i64, scratch_operands = 1 : i64, tpu.core_type = #tpu.core_type<tc>, window_params = [{transform_indices = @transform_0, window_bounds = array<i64: 16, 256>}, {transform_indices = @transform_1, window_bounds = array<i64: 1, 256, 256>}, {transform_indices = @transform_2, window_bounds = array<i64: 1, 1, 256>}, {transform_indices = @transform_3, window_bounds = array<i64: 16, 256>}]} {
    %c0_i32 = arith.constant 0 : i32
    %0 = arith.cmpi eq, %arg1, %c0_i32 : i32
    %1 = arith.extui %0 : i1 to i32
    %c0_i32_0 = arith.constant 0 : i32
    %2 = arith.cmpi ne, %1, %c0_i32_0 : i32
    scf.if %2 {
      %c0_12 = arith.constant 0 : index
      %c0_13 = arith.constant 0 : index
      %19 = vector.load %arg2[%c0_12, %c0_13] : memref<16x256xf32, #tpu.memory_space<vmem>>, vector<16x256xf32>
      %20 = arith.mulf %19, %19 : vector<16x256xf32>
      %cst_14 = arith.constant dense<0.000000e+00> : vector<16xf32>
      %21 = vector.multi_reduction <add>, %20, %cst_14 [1] : vector<16x256xf32> to vector<16xf32>
      %22 = vector.shape_cast %21 : vector<16xf32> to vector<16x1xf32>
      %cst_15 = arith.constant 2.560000e+02 : f32
      %23 = vector.broadcast %cst_15 : f32 to vector<16x1xf32>
      %24 = arith.divf %22, %23 : vector<16x1xf32>
      %cst_16 = arith.constant 9.99999993E-9 : f32
      %25 = vector.broadcast %cst_16 : f32 to vector<16x1xf32>
      %26 = arith.addf %24, %25 : vector<16x1xf32>
      %27 = math.rsqrt %26 : vector<16x1xf32>
      %28 = vector.broadcast %27 : vector<16x1xf32> to vector<16x256xf32>
      %29 = arith.mulf %19, %28 : vector<16x256xf32>
      %c0_17 = arith.constant 0 : index
      %c0_18 = arith.constant 0 : index
      %30 = vector.load %arg6[%c0_17, %c0_18] : memref<16x256xf32, #tpu.memory_space<vmem>>, vector<16x256xf32>
      tpu.vector_store %arg6[%c0_17, %c0_18], %29 {strides = array<i32>} : memref<16x256xf32, #tpu.memory_space<vmem>>, vector<16x256xf32>,
    } else {
    }
    %c0 = arith.constant 0 : index
    %c0_1 = arith.constant 0 : index
    %3 = vector.load %arg6[%c0, %c0_1] : memref<16x256xf32, #tpu.memory_space<vmem>>, vector<16x256xf32>
    %4 = arith.truncf %3 : vector<16x256xf32> to vector<16x256xbf16>
    %c0_2 = arith.constant 0 : index
    %c0_3 = arith.constant 0 : index
    %c0_4 = arith.constant 0 : index
    %5 = vector.load %arg3[%c0_2, %c0_3, %c0_4] : memref<1x256x256xbf16, #tpu.memory_space<vmem>>, vector<1x256x256xbf16>
    %6 = vector.shape_cast %5 : vector<1x256x256xbf16> to vector<256x256xbf16>
    %cst = arith.constant dense<0.000000e+00> : vector<16x256xf32>
    %7 = tpu.matmul %4, %6, %cst {dimension_numbers = #tpu.dot_dimension_numbers<[1], [0], [0], [1], [0, 0, 1, 1], [], []>} : vector<16x256xbf16>, vector<256x256xbf16>, vector<16x256xf32> -> vector<16x256xf32>
    %c0_5 = arith.constant 0 : index
    %c0_6 = arith.constant 0 : index
    %c0_7 = arith.constant 0 : index
    %8 = vector.load %arg4[%c0_5, %c0_6, %c0_7] : memref<1x1x256xf32, #tpu.memory_space<vmem>>, vector<1x1x256xf32>
    %9 = vector.shape_cast %8 : vector<1x1x256xf32> to vector<1x256xf32>
    %10 = vector.broadcast %9 : vector<1x256xf32> to vector<16x256xf32>
    %11 = arith.addf %7, %10 : vector<16x256xf32>
    %cst_8 = arith.constant 2.000000e-01 : f32
    %12 = vector.broadcast %cst_8 : f32 to vector<16x256xf32>
    %13 = arith.mulf %12, %11 : vector<16x256xf32>
    %14 = arith.maximumf %11, %13 : vector<16x256xf32>
    %c0_9 = arith.constant 0 : index
    %c0_10 = arith.constant 0 : index
    %15 = vector.load %arg6[%c0_9, %c0_10] : memref<16x256xf32, #tpu.memory_space<vmem>>, vector<16x256xf32>
    tpu.vector_store %arg6[%c0_9, %c0_10], %14 {strides = array<i32>} : memref<16x256xf32, #tpu.memory_space<vmem>>, vector<16x256xf32>,
    %c3_i32 = arith.constant 3 : i32
    %16 = arith.cmpi eq, %arg1, %c3_i32 : i32
    %17 = arith.extui %16 : i1 to i32
    %c0_i32_11 = arith.constant 0 : i32
    %18 = arith.cmpi ne, %17, %c0_i32_11 : i32
    scf.if %18 {
      %c0_12 = arith.constant 0 : index
      %c0_13 = arith.constant 0 : index
      %19 = vector.load %arg6[%c0_12, %c0_13] : memref<16x256xf32, #tpu.memory_space<vmem>>, vector<16x256xf32>
      %c0_14 = arith.constant 0 : index
      %c0_15 = arith.constant 0 : index
      %20 = vector.load %arg5[%c0_14, %c0_15] : memref<16x256xf32, #tpu.memory_space<vmem>>, vector<16x256xf32>
      tpu.vector_store %arg5[%c0_14, %c0_15], %19 {strides = array<i32>} : memref<16x256xf32, #tpu.memory_space<vmem>>, vector<16x256xf32>,
    } else {
    }
    return
  }
  func.func @transform_0(%arg0: i32, %arg1: i32) -> (i32, i32) {
    %c0_i32 = arith.constant 0 : i32
    %c0_i32_0 = arith.constant 0 : i32
    return %arg0, %c0_i32 : i32, i32
  }
  func.func @transform_1(%arg0: i32, %arg1: i32) -> (i32, i32, i32) {
    %c0_i32 = arith.constant 0 : i32
    %c0_i32_0 = arith.constant 0 : i32
    %c0_i32_1 = arith.constant 0 : i32
    return %arg1, %c0_i32, %c0_i32_0 : i32, i32, i32
  }
  func.func @transform_2(%arg0: i32, %arg1: i32) -> (i32, i32, i32) {
    %c0_i32 = arith.constant 0 : i32
    %c0_i32_0 = arith.constant 0 : i32
    %c0_i32_1 = arith.constant 0 : i32
    return %arg1, %c0_i32, %c0_i32_0 : i32, i32, i32
  }
  func.func @transform_3(%arg0: i32, %arg1: i32) -> (i32, i32) {
    %c0_i32 = arith.constant 0 : i32
    %c0_i32_0 = arith.constant 0 : i32
    return %arg0, %c0_i32 : i32, i32
  }
}

</mosaic_0001>

<llo_original>
// kernel: tpu_custom_call.1
$region0: #{tpu_custom_call.1}
  #allocation0 [shape = 'u32[]', space=smem, size = 0x4, offset = 0x4, fixed_abs, tag = 'smem constant byte address 0x4 - core index']
  #allocation1 [shape = 'u32[144,128]{1,0:T(1,128)}', space=vmem, size = 0x12000, scoped, tag = 'internal scratch']
  #allocation2 [shape = 'f32[16,256]{1,0:T(8,128)}', space=vmem, size = 0x4000, scoped, tag = 'scratch operand']
  %s0 = inlined_call_operand.hbm [shape: f32[16,256], index: 0, kind: input, shape index: {}]
  %s1 = inlined_call_operand.hbm [shape: bf16[4,256,256], index: 1, kind: input, shape index: {}]
  %s2 = inlined_call_operand.hbm [shape: f32[4,1,256], index: 2, kind: input, shape index: {}]
  %s3 = inlined_call_operand.hbm [shape: f32[16,256], index: 3, kind: output, shape index: {}]
  %s4 = sld [smem:[#allocation0]]
  $region65: #{tpu_custom_call.1} parent=0
    _
  %s6 = ssub.s32 1, %s4
  %s7 = scalar_select 0, %s6, %s4
  $region1: #{tpu_custom_call.1} parent=0
    #allocation3 [shape = 'u8[16384]{0}', space=vmem, size = 0x4000, scoped, tag = 'input window, operand 0, single buffered']
    #allocation4 [shape = 's32[2]{0}', space=sflag, size = 0x8, scoped, tag = 'scoped memory for tpu_custom_call.1']
    #allocation5 [shape = 's32[2]{0}', space=sflag, size = 0x8, scoped, tag = 'scoped memory for tpu_custom_call.1']
    #allocation6 [shape = 'u8[262144]{0}', space=vmem, size = 0x40000, scoped, tag = 'input window, operand 1']
    #allocation7 [shape = 's32[2]{0}', space=sflag, size = 0x8, scoped, tag = 'scoped memory for tpu_custom_call.1']
    #allocation8 [shape = 'u8[2048]{0}', space=vmem, size = 0x800, scoped, tag = 'input window, operand 2']
    #allocation9 [shape = 'u8[16384]{0}', space=vmem, size = 0x4000, scoped, tag = 'output window, operand 0, single buffered']
    %8 = vsyncpa [#allocation4], 0
    %9 = vsyncpa [#allocation7], 0
    %s10 = scalar_lea.sflag [#allocation7], 1
    %11 = vsyncpa %s10, 0
    %12 = vsyncpa [#allocation5], 0
    loop: start=0, step=1, limit=6
    $region2: #{tpu_custom_call.1} parent=1 // loop_pre_header
      _
    $region3: #{tpu_custom_call.1} parent=1 // loop_header
      %s14 = sphi 0, %s18
      %p15 = scmp.ge.s32.totalorder %s14, 6
      %s21 = sphi 0, %s33
      %s22 = sphi 0, %s29
      %s23 = sphi 0, %s21
      %s24 = sphi 0, %s22
      %s25 = sphi 0, %s23
      %s26 = sphi 0, %s24
      %s36 = sphi 0, %s38
      %s39 = sphi 0, %s36
      %s40 = sphi 0, %s39
      %s56 = sphi 0, %s40
      %s62 = sphi 0, %s64
      %s65 = sphi 0, %s62
      %s66 = sphi 0, %s65
      %s82 = sphi 0, %s66
      %s88 = sphi 0, %s90
      %s91 = sphi 0, %s88
      %s92 = sphi 0, %s91
      %s108 = sphi 0, %s92
      %s114 = sphi 0, %s116
      %s117 = sphi 0, %s114
      %s118 = sphi 0, %s117
      %s134 = sphi 0, %s118
    $region4: #{tpu_custom_call.1} parent=1 // loop_header_branch
      %17 = sbr.rel (%p15) target = $region8
    $region5: #{tpu_custom_call.1} parent=1 // loop_body
      %s19 = ssub.s32 %s14, 1
      %s20 = ssub.s32 %s14, 2
      %s27 = sadd.s32 1, %s22
      %p28 = scmp.ge.s32.totalorder %s27, 4
      %s29 = scalar_select %p28, 0, %s27
      %s30 = sadd.s32 1, %s21
      %s31 = scalar_select %p28, %s30, %s21
      %p32 = scmp.ge.s32.totalorder %s31, 1
      %s33 = scalar_select %p32, 0, %s31
      %s34 = ssub.s32 %s21, %s33
      %p35 = scmp.eq.s32.totalorder %s34, 0
      %s37 = sadd.s32 %s36, 1
      %s38 = scalar_select %p35, %s36, %s37
      %p41 = pneg %p35
      %p42 = scmp.eq.s32.totalorder %s14, 3
      %p43 = por %p41, %p42
      %p44 = scmp.ne.s32.totalorder %s36, %s39
      %p45 = scmp.eq.s32.totalorder %s14, 0
      %p46 = por %p44, %p45
      %p47 = scmp.ne.s32.totalorder %s36, %s39
      %p48 = scmp.eq.s32.totalorder %s19, 3
      %p49 = por %p47, %p48
      %p50 = scmp.ne.s32.totalorder %s39, %s40
      %p51 = scmp.eq.s32.totalorder %s19, 0
      %p52 = por %p50, %p51
      %p53 = scmp.ne.s32.totalorder %s39, %s40
      %p54 = scmp.eq.s32.totalorder %s20, 3
      %p55 = por %p53, %p54
      %p57 = scmp.ne.s32.totalorder %s40, %s56
      %p58 = scmp.eq.s32.totalorder %s20, 0
      %p59 = por %p57, %p58
      %s60 = ssub.s32 %s22, %s29
      %p61 = scmp.eq.s32.totalorder %s60, 0
      %s63 = sadd.s32 %s62, 1
      %s64 = scalar_select %p61, %s62, %s63
      %p67 = pneg %p61
      %p68 = scmp.eq.s32.totalorder %s14, 3
      %p69 = por %p67, %p68
      %p70 = scmp.ne.s32.totalorder %s62, %s65
      %p71 = scmp.eq.s32.totalorder %s14, 0
      %p72 = por %p70, %p71
      %p73 = scmp.ne.s32.totalorder %s62, %s65
      %p74 = scmp.eq.s32.totalorder %s19, 3
      %p75 = por %p73, %p74
      %p76 = scmp.ne.s32.totalorder %s65, %s66
      %p77 = scmp.eq.s32.totalorder %s19, 0
      %p78 = por %p76, %p77
      %p79 = scmp.ne.s32.totalorder %s65, %s66
      %p80 = scmp.eq.s32.totalorder %s20, 3
      %p81 = por %p79, %p80
      %p83 = scmp.ne.s32.totalorder %s66, %s82
      %p84 = scmp.eq.s32.totalorder %s20, 0
      %p85 = por %p83, %p84
      %s86 = ssub.s32 %s22, %s29
      %p87 = scmp.eq.s32.totalorder %s86, 0
      %s89 = sadd.s32 %s88, 1
      %s90 = scalar_select %p87, %s88, %s89
      %p93 = pneg %p87
      %p94 = scmp.eq.s32.totalorder %s14, 3
      %p95 = por %p93, %p94
      %p96 = scmp.ne.s32.totalorder %s88, %s91
      %p97 = scmp.eq.s32.totalorder %s14, 0
      %p98 = por %p96, %p97
      %p99 = scmp.ne.s32.totalorder %s88, %s91
      %p100 = scmp.eq.s32.totalorder %s19, 3
      %p101 = por %p99, %p100
      %p102 = scmp.ne.s32.totalorder %s91, %s92
      %p103 = scmp.eq.s32.totalorder %s19, 0
      %p104 = por %p102, %p103
      %p105 = scmp.ne.s32.totalorder %s91, %s92
      %p106 = scmp.eq.s32.totalorder %s20, 3
      %p107 = por %p105, %p106
      %p109 = scmp.ne.s32.totalorder %s92, %s108
      %p110 = scmp.eq.s32.totalorder %s20, 0
      %p111 = por %p109, %p110
      %s112 = ssub.s32 %s21, %s33
      %p113 = scmp.eq.s32.totalorder %s112, 0
      %s115 = sadd.s32 %s114, 1
      %s116 = scalar_select %p113, %s114, %s115
      %p119 = pneg %p113
      %p120 = scmp.eq.s32.totalorder %s14, 3
      %p121 = por %p119, %p120
      %p122 = scmp.ne.s32.totalorder %s114, %s117
      %p123 = scmp.eq.s32.totalorder %s14, 0
      %p124 = por %p122, %p123
      %p125 = scmp.ne.s32.totalorder %s114, %s117
      %p126 = scmp.eq.s32.totalorder %s19, 3
      %p127 = por %p125, %p126
      %p128 = scmp.ne.s32.totalorder %s117, %s118
      %p129 = scmp.eq.s32.totalorder %s19, 0
      %p130 = por %p128, %p129
      %p131 = scmp.ne.s32.totalorder %s117, %s118
      %p132 = scmp.eq.s32.totalorder %s20, 3
      %p133 = por %p131, %p132
      %p135 = scmp.ne.s32.totalorder %s118, %s134
      %p136 = scmp.eq.s32.totalorder %s20, 0
      %p137 = por %p135, %p136
      %p138 = scmp.le.s32.totalorder 1, %s14
      %p139 = scmp.lt.s32.totalorder %s14, 5
      %p140 = pnand %p138, %p139
      %p141 = pneg %p140
      // Predicated region
      $region9: #{tpu_custom_call.1} parent=5 // pred_check
        _
      $region10: #{tpu_custom_call.1} parent=5 // pred_check_branch
        %143 = sbr.rel (%p140) target = $region12
      $region11: #{tpu_custom_call.1} parent=5 // pred_region
        %s144 = ssub.s32 %s14, 1
        // Predicated region
        $region13: #{tpu_custom_call.1} parent=11 // pred_check
          %p145 = pneg %p52
        $region14: #{tpu_custom_call.1} parent=11 // pred_check_branch
          %147 = sbr.rel (%p145) target = $region16
        $region15: #{tpu_custom_call.1} parent=11 // pred_region
          %s148 = smul.u32 2, %s23
          %s150 = ssub.s32 512, 512
          %151 = vsyncadd [#allocation4], %s150
          %s152 = smul.addr %s148, 2
          %s153 = smul.addr %s152, 128
          %s154 = scalar_lea.hbm %s0, %s153
          %s155 = sshll.u32 [#allocation3], 4
          %s156 = int_to_ptr.vmem [resolvable:$true] %s155
          %161 = dma.hbm_to_vmem [thread:$0]  %s154, 512, %s156, [#allocation4], 256, 256, 16
        $region16: #{tpu_custom_call.1} parent=11 // pred_fallthru
          _
      $region12: #{tpu_custom_call.1} parent=5 // pred_fallthru
        _
      %p162 = scmp.lt.s32.totalorder %s14, 4
      // Predicated region
      $region17: #{tpu_custom_call.1} parent=5 // pred_check
        %p163 = pneg %p162
      $region18: #{tpu_custom_call.1} parent=5 // pred_check_branch
        %165 = sbr.rel (%p163) target = $region20
      $region19: #{tpu_custom_call.1} parent=5 // pred_region
        // Predicated region
        $region21: #{tpu_custom_call.1} parent=19 // pred_check
          %p166 = pneg %p72
        $region22: #{tpu_custom_call.1} parent=19 // pred_check_branch
          %168 = sbr.rel (%p166) target = $region24
        $region23: #{tpu_custom_call.1} parent=19 // pred_region
          %s169 = sand.u32 %s14, 1
          %s170 = scalar_lea.sflag [#allocation7], %s169
          %s171 = sand.u32 %s62, 1
          %s172 = smul.addr %s171, 256
          %s173 = scalar_lea.vmem [#allocation6], %s172
          %s175 = ssub.s32 4096, 4096
          %176 = vsyncadd %s170, %s175
          %s177 = smul.addr %s22, 64
          %s178 = smul.addr %s177, 64
          %s179 = scalar_lea.hbm %s1, %s178
          %s180 = sshll.u32 %s173, 4
          %s181 = int_to_ptr.vmem [resolvable:$true] %s180
          %186 = dma.hbm_to_vmem [thread:$0]  %s179, 4096, %s181, %s170, 128, 128, 8
        $region24: #{tpu_custom_call.1} parent=19 // pred_fallthru
          _
        // Predicated region
        $region25: #{tpu_custom_call.1} parent=19 // pred_check
          %p187 = pneg %p98
        $region26: #{tpu_custom_call.1} parent=19 // pred_check_branch
          %189 = sbr.rel (%p187) target = $region28
        $region27: #{tpu_custom_call.1} parent=19 // pred_region
          %s190 = sand.u32 %s14, 1
          %s191 = scalar_lea.sflag [#allocation7], %s190
          %s192 = sand.u32 %s88, 1
          %s193 = smul.addr %s192, 2
          %s194 = scalar_lea.vmem [#allocation8], %s193
          %s196 = ssub.s32 32, 32
          %197 = vsyncadd %s191, %s196
          %s198 = smul.addr %s22, 2
          %s199 = smul.addr %s198, 16
          %s200 = scalar_lea.hbm %s2, %s199
          %s202 = sshll.u32 %s194, 4
          %s203 = int_to_ptr.vmem [resolvable:$true] %s202
          %205 = dma.hbm_to_vmem [thread:$0]  %s200, 32, %s203, %s191
        $region28: #{tpu_custom_call.1} parent=19 // pred_fallthru
          _
      $region20: #{tpu_custom_call.1} parent=5 // pred_fallthru
        _
      %p206 = scmp.le.s32.totalorder 1, %s14
      %p207 = scmp.lt.s32.totalorder %s14, 5
      %p208 = pnand %p206, %p207
      %p209 = pneg %p208
      // Predicated region
      $region29: #{tpu_custom_call.1} parent=5 // pred_check
        _
      $region30: #{tpu_custom_call.1} parent=5 // pred_check_branch
        %211 = sbr.rel (%p208) target = $region32
      $region31: #{tpu_custom_call.1} parent=5 // pred_region
        %s212 = ssub.s32 %s14, 1
        // Predicated region
        $region33: #{tpu_custom_call.1} parent=31 // pred_check
          %p213 = pneg %p52
        $region34: #{tpu_custom_call.1} parent=31 // pred_check_branch
          %215 = sbr.rel (%p213) target = $region36
        $region35: #{tpu_custom_call.1} parent=31 // pred_region
          %216 = dma.done [#allocation4], 512
        $region36: #{tpu_custom_call.1} parent=31 // pred_fallthru
          _
        %s217 = sand.u32 %s19, 1
        %s218 = scalar_lea.sflag [#allocation7], %s217
        %s219 = sand.u32 %s65, 1
        %s220 = smul.addr %s219, 256
        %s221 = scalar_lea.vmem [#allocation6], %s220
        // Predicated region
        $region37: #{tpu_custom_call.1} parent=31 // pred_check
          %p222 = pneg %p78
        $region38: #{tpu_custom_call.1} parent=31 // pred_check_branch
          %224 = sbr.rel (%p222) target = $region40
        $region39: #{tpu_custom_call.1} parent=31 // pred_region
          %225 = dma.done %s218, 4096
        $region40: #{tpu_custom_call.1} parent=31 // pred_fallthru
          _
        %s226 = sand.u32 %s19, 1
        %s227 = scalar_lea.sflag [#allocation7], %s226
        %s228 = sand.u32 %s91, 1
        %s229 = smul.addr %s228, 2
        %s230 = scalar_lea.vmem [#allocation8], %s229
        // Predicated region
        $region41: #{tpu_custom_call.1} parent=31 // pred_check
          %p231 = pneg %p104
        $region42: #{tpu_custom_call.1} parent=31 // pred_check_branch
          %233 = sbr.rel (%p231) target = $region44
        $region43: #{tpu_custom_call.1} parent=31 // pred_region
          %234 = dma.done %s227, 32
        $region44: #{tpu_custom_call.1} parent=31 // pred_fallthru
          _
        %p235 = pneg %p52
        %p236 = pneg %p49
        %s237 = sand.u32 %s19, 1
        %s238 = scalar_lea.sflag [#allocation7], %s237
        %s239 = sand.u32 %s65, 1
        %s240 = smul.addr %s239, 256
        %s241 = scalar_lea.vmem [#allocation6], %s240
        %p242 = pneg %p78
        %p243 = pneg %p75
        %s244 = sand.u32 %s19, 1
        %s245 = scalar_lea.sflag [#allocation7], %s244
        %s246 = sand.u32 %s91, 1
        %s247 = smul.addr %s246, 2
        %s248 = scalar_lea.vmem [#allocation8], %s247
        %p249 = pneg %p104
        %p250 = pneg %p101
        %p251 = pneg %p130
        %p252 = pneg %p127
        %s253 = smul.u32 2, %s23
        %s254 = smul.u32 2, %s23
        %p255 = scmp.eq.s32.totalorder %s24, 0
        // Predicated region
        $region45: #{tpu_custom_call.1} parent=31 // pred_check
          %p256 = pneg %p255
        $region46: #{tpu_custom_call.1} parent=31 // pred_check_branch
          %258 = sbr.rel (%p256) target = $region48
        $region47: #{tpu_custom_call.1} parent=31 // pred_region
          %v259 = vld [vmem:[#allocation3] sm:$0xff]
          %v260 = vld [vmem:[#allocation3 + $0x8] sm:$0xff]
          %v261 = vld [vmem:[#allocation3 + $0x10] sm:$0xff]
          %v262 = vld [vmem:[#allocation3 + $0x18] sm:$0xff]
          %v263 = vmul.f32 %v259, %v259
          %v264 = vmul.f32 %v260, %v260
          %v265 = vmul.f32 %v261, %v261
          %v266 = vmul.f32 %v262, %v262
          %v267 = vadd.f32 %v263, %v264
          %268 = vadd.xlane.f32.xlu0 %v267
          %v269 = vpop.xlane.xlu0 %268
          %v270 = vadd.f32 %v265, %v266
          %271 = vadd.xlane.f32.xlu0 %v270
          %v272 = vpop.xlane.xlu0 %271
          %v273 = vrcp.pop 256.0
          %v274 = vmul.f32 %v269, %v273
          %v275 = vmul.f32 %v272, %v273
          %v276 = vadd.f32 %v274, 1e-08
          %v277 = vadd.f32 %v275, 1e-08
          %v278 = vrsqrt.pop %v276
          %v279 = vrsqrt.pop %v277
          %v280 = vmul.f32 %v259, %v278
          %v281 = vmul.f32 %v260, %v278
          %v282 = vmul.f32 %v261, %v279
          %v283 = vmul.f32 %v262, %v279
          %284 = vst [vmem:[#allocation2] sm:$0xff] %v280
          %285 = vst [vmem:[#allocation2 + $0x8] sm:$0xff] %v281
          %286 = vst [vmem:[#allocation2 + $0x10] sm:$0xff] %v282
          %287 = vst [vmem:[#allocation2 + $0x18] sm:$0xff] %v283
        $region48: #{tpu_custom_call.1} parent=31 // pred_fallthru
          _
        %v288 = vld [vmem:[#allocation2] sm:$0xff]
        %v289 = vld [vmem:[#allocation2 + $0x8] sm:$0xff]
        %v290 = vld [vmem:[#allocation2 + $0x10] sm:$0xff]
        %v291 = vld [vmem:[#allocation2 + $0x18] sm:$0xff]
        %v292 = vpack.c.bf16 %v290, %v288
        %v293 = vpack.c.bf16 %v291, %v289
        %v294 = vld [vmem:[%s221] sm:$0xff]
        %v295 = vld [vmem:[%s221 + $0x8] sm:$0xff]
        %v296 = vld [vmem:[%s221 + $0x10] sm:$0xff]
        %v297 = vld [vmem:[%s221 + $0x18] sm:$0xff]
        %v298 = vld [vmem:[%s221 + $0x20] sm:$0xff]
        %v299 = vld [vmem:[%s221 + $0x28] sm:$0xff]
        %v300 = vld [vmem:[%s221 + $0x30] sm:$0xff]
        %v301 = vld [vmem:[%s221 + $0x38] sm:$0xff]
        %v302 = vld [vmem:[%s221 + $0x40] sm:$0xff]
        %v303 = vld [vmem:[%s221 + $0x48] sm:$0xff]
        %v304 = vld [vmem:[%s221 + $0x50] sm:$0xff]
        %v305 = vld [vmem:[%s221 + $0x58] sm:$0xff]
        %v306 = vld [vmem:[%s221 + $0x60] sm:$0xff]
        %v307 = vld [vmem:[%s221 + $0x68] sm:$0xff]
        %v308 = vld [vmem:[%s221 + $0x70] sm:$0xff]
        %v309 = vld [vmem:[%s221 + $0x78] sm:$0xff]
        %v310 = vld [vmem:[%s221 + $0x80] sm:$0xff]
        %v311 = vld [vmem:[%s221 + $0x88] sm:$0xff]
        %v312 = vld [vmem:[%s221 + $0x90] sm:$0xff]
        %v313 = vld [vmem:[%s221 + $0x98] sm:$0xff]
        %v314 = vld [vmem:[%s221 + $0xa0] sm:$0xff]
        %v315 = vld [vmem:[%s221 + $0xa8] sm:$0xff]
        %v316 = vld [vmem:[%s221 + $0xb0] sm:$0xff]
        %v317 = vld [vmem:[%s221 + $0xb8] sm:$0xff]
        %v318 = vld [vmem:[%s221 + $0xc0] sm:$0xff]
        %v319 = vld [vmem:[%s221 + $0xc8] sm:$0xff]
        %v320 = vld [vmem:[%s221 + $0xd0] sm:$0xff]
        %v321 = vld [vmem:[%s221 + $0xd8] sm:$0xff]
        %v322 = vld [vmem:[%s221 + $0xe0] sm:$0xff]
        %v323 = vld [vmem:[%s221 + $0xe8] sm:$0xff]
        %v324 = vld [vmem:[%s221 + $0xf0] sm:$0xff]
        %v325 = vld [vmem:[%s221 + $0xf8] sm:$0xff]
        %v326 = vld [vmem:[%s230] sm:$0x3]
        %v328 = vlaneseq
        %v329 = vshrl.u32 %v328, 7
        %v330 = vsub.s32 0, %v329
        %v331 = vrot.slane %v326, %v330
        %v332 = vlaneseq
        %v333 = vshrl.u32 %v332, 7
        %v334 = vsub.s32 1, %v333
        %v335 = vrot.slane %v326, %v334
        %v370 = vunpack.c.l.b16 %v294
        %v371 = vunpack.c.h.b16 %v294
        %v372 = vunpack.c.l.b16 %v295
        %v373 = vunpack.c.h.b16 %v295
        %v374 = vunpack.c.l.b16 %v296
        %v375 = vunpack.c.h.b16 %v296
        %v376 = vunpack.c.l.b16 %v297
        %v377 = vunpack.c.h.b16 %v297
        %v378 = vunpack.c.l.b16 %v298
        %v379 = vunpack.c.h.b16 %v298
        %v380 = vunpack.c.l.b16 %v299
        %v381 = vunpack.c.h.b16 %v299
        %v382 = vunpack.c.l.b16 %v300
        %v383 = vunpack.c.h.b16 %v300
        %v384 = vunpack.c.l.b16 %v301
        %v385 = vunpack.c.h.b16 %v301
        %v386 = vunpack.c.l.b16 %v302
        %v387 = vunpack.c.h.b16 %v302
        %v388 = vunpack.c.l.b16 %v303
        %v389 = vunpack.c.h.b16 %v303
        %v390 = vunpack.c.l.b16 %v304
        %v391 = vunpack.c.h.b16 %v304
        %v392 = vunpack.c.l.b16 %v305
        %v393 = vunpack.c.h.b16 %v305
        %v394 = vunpack.c.l.b16 %v306
        %v395 = vunpack.c.h.b16 %v306
        %v396 = vunpack.c.l.b16 %v307
        %v397 = vunpack.c.h.b16 %v307
        %v398 = vunpack.c.l.b16 %v308
        %v399 = vunpack.c.h.b16 %v308
        %v400 = vunpack.c.l.b16 %v309
        %v401 = vunpack.c.h.b16 %v309
        %v402 = vunpack.c.l.b16 %v310
        %v403 = vunpack.c.h.b16 %v310
        %v404 = vunpack.c.l.b16 %v311
        %v405 = vunpack.c.h.b16 %v311
        %v406 = vunpack.c.l.b16 %v312
        %v407 = vunpack.c.h.b16 %v312
        %v408 = vunpack.c.l.b16 %v313
        %v409 = vunpack.c.h.b16 %v313
        %v410 = vunpack.c.l.b16 %v314
        %v411 = vunpack.c.h.b16 %v314
        %v412 = vunpack.c.l.b16 %v315
        %v413 = vunpack.c.h.b16 %v315
        %v414 = vunpack.c.l.b16 %v316
        %v415 = vunpack.c.h.b16 %v316
        %v416 = vunpack.c.l.b16 %v317
        %v417 = vunpack.c.h.b16 %v317
        %v418 = vunpack.c.l.b16 %v318
        %v419 = vunpack.c.h.b16 %v318
        %v420 = vunpack.c.l.b16 %v319
        %v421 = vunpack.c.h.b16 %v319
        %v422 = vunpack.c.l.b16 %v320
        %v423 = vunpack.c.h.b16 %v320
        %v424 = vunpack.c.l.b16 %v321
        %v425 = vunpack.c.h.b16 %v321
        %v426 = vunpack.c.l.b16 %v322
        %v427 = vunpack.c.h.b16 %v322
        %v428 = vunpack.c.l.b16 %v323
        %v429 = vunpack.c.h.b16 %v323
        %v430 = vunpack.c.l.b16 %v324
        %v431 = vunpack.c.h.b16 %v324
        %v432 = vunpack.c.l.b16 %v325
        %v433 = vunpack.c.h.b16 %v325
        %v434 = vpack.c.b16 %v372, %v370
        %v435 = vpack.c.b16 %v373, %v371
        %v436 = vpack.c.b16 %v376, %v374
        %v437 = vpack.c.b16 %v377, %v375
        %v438 = vpack.c.b16 %v380, %v378
        %v439 = vpack.c.b16 %v381, %v379
        %v440 = vpack.c.b16 %v384, %v382
        %v441 = vpack.c.b16 %v385, %v383
        %v442 = vpack.c.b16 %v388, %v386
        %v443 = vpack.c.b16 %v389, %v387
        %v444 = vpack.c.b16 %v392, %v390
        %v445 = vpack.c.b16 %v393, %v391
        %v446 = vpack.c.b16 %v396, %v394
        %v447 = vpack.c.b16 %v397, %v395
        %v448 = vpack.c.b16 %v400, %v398
        %v449 = vpack.c.b16 %v401, %v399
        %v450 = vpack.c.b16 %v404, %v402
        %v451 = vpack.c.b16 %v405, %v403
        %v452 = vpack.c.b16 %v408, %v406
        %v453 = vpack.c.b16 %v409, %v407
        %v454 = vpack.c.b16 %v412, %v410
        %v455 = vpack.c.b16 %v413, %v411
        %v456 = vpack.c.b16 %v416, %v414
        %v457 = vpack.c.b16 %v417, %v415
        %v458 = vpack.c.b16 %v420, %v418
        %v459 = vpack.c.b16 %v421, %v419
        %v460 = vpack.c.b16 %v424, %v422
        %v461 = vpack.c.b16 %v425, %v423
        %v462 = vpack.c.b16 %v428, %v426
        %v463 = vpack.c.b16 %v429, %v427
        %v464 = vpack.c.b16 %v432, %v430
        %v465 = vpack.c.b16 %v433, %v431
        %498 = vmatprep.subr.bf16.mxu0 %v435
        %499 = vmatpush1.bf16.msra.mxu0 %v434
        %500 = vmatprep.subr.bf16.mxu0 %v437
        %501 = vmatpush1.bf16.msra.mxu0 %v436
        %502 = vmatprep.subr.bf16.mxu0 %v439
        %503 = vmatpush1.bf16.msra.mxu0 %v438
        %504 = vmatprep.subr.bf16.mxu0 %v441
        %505 = vmatpush1.bf16.msra.mxu0 %v440
        %506 = vmatprep.subr.bf16.mxu0 %v443
        %507 = vmatpush1.bf16.msra.mxu0 %v442
        %508 = vmatprep.subr.bf16.mxu0 %v445
        %509 = vmatpush1.bf16.msra.mxu0 %v444
        %510 = vmatprep.subr.bf16.mxu0 %v447
        %511 = vmatpush1.bf16.msra.mxu0 %v446
        %512 = vmatprep.subr.bf16.mxu0 %v449
        %513 = vmatpush1.bf16.msra.mxu0 %v448
        %514 = vmatprep.subr.bf16.mxu0 %v451
        %515 = vmatpush1.bf16.msra.mxu0 %v450
        %516 = vmatprep.subr.bf16.mxu0 %v453
        %517 = vmatpush1.bf16.msra.mxu0 %v452
        %518 = vmatprep.subr.bf16.mxu0 %v455
        %519 = vmatpush1.bf16.msra.mxu0 %v454
        %520 = vmatprep.subr.bf16.mxu0 %v457
        %521 = vmatpush1.bf16.msra.mxu0 %v456
        %522 = vmatprep.subr.bf16.mxu0 %v459
        %523 = vmatpush1.bf16.msra.mxu0 %v458
        %524 = vmatprep.subr.bf16.mxu0 %v461
        %525 = vmatpush1.bf16.msra.mxu0 %v460
        %526 = vmatprep.subr.bf16.mxu0 %v463
        %527 = vmatpush1.bf16.msra.mxu0 %v462
        %528 = vmatprep.subr.bf16.mxu0 %v465
        %529 = vmatpush1.bf16.msra.mxu0 %v464
        %530 = vmatprep.mubr.bf16.mxu0 %v293
        %531 = vmatmul.mubr.bf16.gmra.mrb[0].mxu0 %v292
        %v532 = vpop.f32.mrb[0].mxu0
        %v533 = vadd.f32 %v331, %v532
        %v534 = vpop.f32.mrb[0].mxu0
        %v535 = vadd.f32 %v335, %v534
        %v536 = vpop.f32.mrb[0].mxu0
        %v537 = vadd.f32 %v331, %v536
        %v538 = vpop.f32.mrb[0].mxu0
        %v539 = vadd.f32 %v335, %v538
        %540 = vdwg.mxu0
        %v541 = vmul.f32 %v533, 0.2
        %v542 = vmul.f32 %v535, 0.2
        %v543 = vmul.f32 %v537, 0.2
        %v544 = vmul.f32 %v539, 0.2
        %v545 = vmax.f32 %v533, %v541
        %v546 = vmax.f32 %v535, %v542
        %v547 = vmax.f32 %v537, %v543
        %v548 = vmax.f32 %v539, %v544
        %549 = vst [vmem:[#allocation2] sm:$0xff] %v545
        %550 = vst [vmem:[#allocation2 + $0x8] sm:$0xff] %v546
        %551 = vst [vmem:[#allocation2 + $0x10] sm:$0xff] %v547
        %552 = vst [vmem:[#allocation2 + $0x18] sm:$0xff] %v548
        %p553 = scmp.eq.s32.totalorder %s24, 3
        // Predicated region
        $region49: #{tpu_custom_call.1} parent=31 // pred_check
          %p554 = pneg %p553
        $region50: #{tpu_custom_call.1} parent=31 // pred_check_branch
          %556 = sbr.rel (%p554) target = $region52
        $region51: #{tpu_custom_call.1} parent=31 // pred_region
          %v557 = vld [vmem:[#allocation2] sm:$0xff]
          %v558 = vld [vmem:[#allocation2 + $0x8] sm:$0xff]
          %v559 = vld [vmem:[#allocation2 + $0x10] sm:$0xff]
          %v560 = vld [vmem:[#allocation2 + $0x18] sm:$0xff]
          %561 = vst [vmem:[#allocation9] sm:$0xff] %v557
          %562 = vst [vmem:[#allocation9 + $0x8] sm:$0xff] %v558
          %563 = vst [vmem:[#allocation9 + $0x10] sm:$0xff] %v559
          %564 = vst [vmem:[#allocation9 + $0x18] sm:$0xff] %v560
        $region52: #{tpu_custom_call.1} parent=31 // pred_fallthru
          _
        // Predicated region
        $region53: #{tpu_custom_call.1} parent=31 // pred_check
          %p565 = pneg %p127
        $region54: #{tpu_custom_call.1} parent=31 // pred_check_branch
          %567 = sbr.rel (%p565) target = $region56
        $region55: #{tpu_custom_call.1} parent=31 // pred_region
          %s568 = smul.u32 2, %s23
          %s570 = ssub.s32 512, 512
          %571 = vsyncadd [#allocation5], %s570
          %s572 = smul.addr %s568, 2
          %s573 = smul.addr %s572, 128
          %s574 = scalar_lea.hbm %s3, %s573
          %s575 = sshll.u32 [#allocation9], 4
          %s576 = int_to_ptr.vmem [resolvable:$true] %s575
          %581 = dma.vmem_to_hbm [thread:$0]  %s576, 512, %s574, [#allocation5], 256, 256, 16
        $region56: #{tpu_custom_call.1} parent=31 // pred_fallthru
          _
        // Predicated region
        $region57: #{tpu_custom_call.1} parent=31 // pred_check
          %p582 = pneg %p127
        $region58: #{tpu_custom_call.1} parent=31 // pred_check_branch
          %584 = sbr.rel (%p582) target = $region60
        $region59: #{tpu_custom_call.1} parent=31 // pred_region
          %585 = dma.done [#allocation5], 512
        $region60: #{tpu_custom_call.1} parent=31 // pred_fallthru
          _
      $region32: #{tpu_custom_call.1} parent=5 // pred_fallthru
        _
      %p586 = scmp.le.s32.totalorder 2, %s14
      // Predicated region
      $region61: #{tpu_custom_call.1} parent=5 // pred_check
        %p587 = pneg %p586
      $region62: #{tpu_custom_call.1} parent=5 // pred_check_branch
        %589 = sbr.rel (%p587) target = $region64
      $region63: #{tpu_custom_call.1} parent=5 // pred_region
        %s590 = ssub.s32 %s14, 2
      $region64: #{tpu_custom_call.1} parent=5 // pred_fallthru
        _
    $region6: #{tpu_custom_call.1} parent=1 // loop_footer
      %s18 = sadd.s32 1, %s14
    $region7: #{tpu_custom_call.1} parent=1 // loop_footer_branch
      %13 = sbr.rel target = $region3
    $region8: #{tpu_custom_call.1} parent=1 // loop_exit
      _
    %591 = vsyncpa [#allocation4], 1
    %s592 = scalar_lea.sflag [#allocation4], 1
    %593 = vsyncpa %s592, 1
    %594 = vsyncpa [#allocation7], 1
    %s595 = scalar_lea.sflag [#allocation7], 1
    %596 = vsyncpa %s595, 1
    %597 = vsyncpa [#allocation5], 1
    %s598 = scalar_lea.sflag [#allocation5], 1
    %599 = vsyncpa %s598, 1

</llo_original>
